<compile_context>
chip_gen: v6e
topology: v6e:2x2x1
jax: 0.10.0
libtpu: 0.0.40
codegen_flags: <defaults>
</compile_context>

<pallas_src>
import jax
import jax.numpy as jnp
from jax.experimental import pallas as pl
from jax.experimental.pallas import tpu as pltpu


FIELD_REGISTRY = {}


def register_field(name):
    def register_field_cls(cls):
        if name in FIELD_REGISTRY:
            raise ValueError("Cannot register duplicate module ({})".format(name))
        FIELD_REGISTRY[name] = cls
        return cls
    return register_field_cls


# ----------------------------------------------------------------------------
# Pallas kernel: single whole-array HBM->HBM DMA identity passthrough.
# ----------------------------------------------------------------------------
def _identity_dma_kernel(x_hbm, o_hbm, sem):
    # One large contiguous DMA saturates HBM bandwidth on v5e/v6e/v7x with no
    # VMEM round trip, no vld/vst slot pressure and no per-step grid overhead.
    cp = pltpu.make_async_copy(x_hbm, o_hbm, sem)
    cp.start()
    cp.wait()


def pallas_identity(x: jax.Array) -> jax.Array:
    """Identity passthrough of `x` via a single HBM->HBM DMA Pallas kernel.

    Only used when the debug flag is set — the production path returns `x`
    directly (zero bytes moved).
    """
    if x.ndim == 0 or x.size == 0:
        return x

    nbytes = int(x.size) * jnp.dtype(x.dtype).itemsize

    return pl.pallas_call(
        _identity_dma_kernel,
        out_shape=jax.ShapeDtypeStruct(x.shape, x.dtype),
        in_specs=[pl.BlockSpec(memory_space=pl.ANY)],   # raw HBM ref, no auto-DMA
        out_specs=pl.BlockSpec(memory_space=pl.ANY),    # raw HBM ref, written by DMA
        scratch_shapes=[pltpu.SemaphoreType.DMA(())],
        cost_estimate=pl.CostEstimate(
            flops=0, transcendentals=0, bytes_accessed=2 * nbytes
        ),
    )(x)


@register_field("abstract_field")
class Field:
    """
    Abstract class for implicit functions (JAX/Pallas mirror of fairnr.Field).
    """

    def __init__(self, args, use_pallas_passthrough: bool = False):
        self.args = args
        self.updates = -1
        # Debug flag: when False (default) tensor kwargs are returned as-is
        # (no kernel launch — the fastest possible identity).
        self.use_pallas_passthrough = use_pallas_passthrough

    def forward(self, **kwargs):
        # TODO(synk): PyTorch `Field.forward` is abstract (raises NotImplementedError);
        # there is no compute to translate.  Tensor kwargs are passed through
        # unchanged by default; the Pallas HBM->HBM DMA path exists only to
        # exercise a runnable TPU kernel when explicitly requested.
        if not kwargs:
            raise NotImplementedError
        out = {}
        for k, v in kwargs.items():
            if isinstance(v, jax.Array) and self.use_pallas_passthrough:
                out[k] = pallas_identity(v)
            else:
                out[k] = v
        return out

    def __call__(self, **kwargs):
        return self.forward(**kwargs)

    @staticmethod
    def add_args(parser):
        pass

    def set_num_updates(self, num_updates):
        self.updates = num_updates


if __name__ == "__main__":
    key = jax.random.PRNGKey(0)
    # Small NCHW input consistent with a typical field query batch.
    x = jax.random.normal(key, (2, 4, 16, 16), dtype=jnp.float32)

    # Enable the Pallas path explicitly so the kernel is actually exercised.
    field = FIELD_REGISTRY["abstract_field"](args=None, use_pallas_passthrough=True)
    field.set_num_updates(0)

    out = field(x=x)
    y = jax.block_until_ready(out["x"])

    assert y.shape == x.shape and y.dtype == x.dtype
    assert bool(jnp.allclose(y, x))

    # Also check the default (no-kernel) fast path preserves semantics.
    field_fast = FIELD_REGISTRY["abstract_field"](args=None)
    out_fast = field_fast(x=x)
    assert out_fast["x"] is x

    print("KERNEL_OK")
</pallas_src>

<mosaic_0001>
module attributes {stable_mosaic.version = 11 : i64} {
  func.func @_identity_dma_kernel(%arg0: memref<2x4x16x16xf32, #tpu.memory_space<any>>, %arg1: memref<2x4x16x16xf32, #tpu.memory_space<any>>, %arg2: memref<!tpu.dma_semaphore, #tpu.memory_space<semaphore_mem>>) attributes {dimension_semantics = [], scalar_prefetch = 0 : i64, scratch_operands = 1 : i64, tpu.core_type = #tpu.core_type<tc>} {
    tpu.enqueue_dma source(%arg0 : memref<2x4x16x16xf32, #tpu.memory_space<any>>) target(%arg1 : memref<2x4x16x16xf32, #tpu.memory_space<any>>) target_semaphore(%arg2 : memref<!tpu.dma_semaphore, #tpu.memory_space<semaphore_mem>>)
    tpu.wait_dma2 semaphore(%arg2 : memref<!tpu.dma_semaphore, #tpu.memory_space<semaphore_mem>>) src(%arg0 : memref<2x4x16x16xf32, #tpu.memory_space<any>>) dst(%arg1 : memref<2x4x16x16xf32, #tpu.memory_space<any>>)
    return
  }
}

</mosaic_0001>

<llo_original>
// kernel: tpu_custom_call.1
$region0: #{tpu_custom_call.1}
  #allocation0 [shape = 'u32[]', space=smem, size = 0x4, offset = 0x4, fixed_abs, tag = 'smem constant byte address 0x4 - core index']
  #allocation1 [shape = 'u32[144,128]{1,0:T(1,128)}', space=vmem, size = 0x12000, scoped, tag = 'internal scratch']
  #allocation2 [shape = 's32[1]{0}', space=sflag, size = 0x4, scoped, tag = 'scratch operand']
  #allocation3 [shape = 's32[]', space=sflag, size = 0x4, offset = 0, fixed_abs, tag = 'sflag constant byte address 0x0 - dummy sync flag']
  #allocation4 [shape = 'u32[0]{0}', space=smem, size = 0, offset = 0, fixed_abs, tag = 'smem constant byte address 0x0 - null']
  %s0 = inlined_call_operand.hbm [shape: f32[2,4,16,16], index: 0, kind: input, shape index: {}]
  %s1 = inlined_call_operand.hbm [shape: f32[2,4,16,16], index: 1, kind: output, shape index: {}]
  %s2 = sld [smem:[#allocation0]]
  $region2: #{tpu_custom_call.1} parent=0
    _
  %s4 = ssub.s32 1, %s2
  %s5 = scalar_select 0, %s4, %s2
  %s7 = sshll.u32 1, 14
  %s8 = sxor.u32 4294967295, %s7
  %12 = dma.general %s0, 2048, %s1, [#allocation2], 131072, [#allocation4], 0, 0
  %s13 = smul.u32 2, 4
  %s14 = smul.u32 %s13, 16
  %s15 = smul.u32 %s14, 1
  %s16 = sshll.u32 %s15, 4
  %17 = dma.done [#allocation2], %s16
  %18 = vsyncmov [#allocation2]
  %s19 = vpop.sfrf %18
  %p20 = scmp.eq.s32.totalorder %s19, 0
  %p21 = pneg %p20
  %23 = shalt.err (%p21)

</llo_original>
